<compile_context>
chip_gen: v5e
topology: v5e:2x2
jax: 0.10.0
libtpu: 0.0.40
codegen_flags: <defaults>
</compile_context>

<pallas_src>
import jax
import jax.numpy as jnp
from jax.experimental import pallas as pl
from jax.experimental.pallas import tpu as pltpu


def _round_up(x, m):
    return (x + m - 1) // m * m


def _choose_tb(b_pad, block_batch):
    """Largest multiple of 128 that divides b_pad, <= block_batch, and keeps
    >=2 grid steps when b_pad allows it (v7x has 2 TensorCores)."""
    n = b_pad // 128
    max_units = max(1, min(max(1, block_batch // 128), n))
    if n >= 2:
        max_units = min(max_units, n // 2)
    for u in range(max_units, 0, -1):
        if n % u == 0:
            return u * 128
    return 128


# ----------------------------- Pallas kernel --------------------------------


def _make_neumf_kernel(num_fc_layers):
    """Kernel body for a fixed number of fully-connected layers.

    Ref order (batch-on-lanes layouts):
      mlp_slab (2*d_mlp, TB) bf16   -- [user_mlp ; item_mlp] features
      mf_slab  (2, d_mf, TB) bf16   -- stacked [user_mf, item_mf]
      W0 (h0, 2*d_mlp) bf16, b0 (h0, 1) bf16,
      [W_k (h_k, h_{k-1}) bf16, b_k (h_k, 1) bf16] * (num_fc_layers - 1),
      w_aff_mlp (h_last, 1) bf16, w_aff_mf (d_mf, 1) bf16,
      b_aff (1, 1) f32 in SMEM,
      out (1, TB) f32.
    """

    def kernel(*refs):
        it = iter(refs)
        f32 = jnp.float32

        mlp = next(it)[...]            # bf16, fed to the MXU natively
        mf_ref = next(it)              # (2, d_mf, TB) bf16

        # First FC layer: single dot on the pre-concatenated feature slab.
        w0 = next(it)[...]             # bf16
        b0 = next(it)[...].astype(f32)
        h = jnp.dot(w0, mlp, preferred_element_type=f32) + b0
        h = jnp.maximum(h, 0.0)

        # Remaining FC layers: Linear -> ReLU (bf16 MXU, f32 accumulate).
        for _ in range(num_fc_layers - 1):
            w = next(it)[...]          # bf16
            b = next(it)[...].astype(f32)
            h = jnp.dot(w, h.astype(w.dtype), preferred_element_type=f32) + b
            h = jnp.maximum(h, 0.0)

        w_aff_mlp = next(it)[...].astype(f32)   # (h_last, 1)
        w_aff_mf = next(it)[...].astype(f32)    # (d_mf, 1)
        b_aff_ref = next(it)                    # (1, 1) f32 in SMEM
        out_ref = next(it)                      # (1, TB) f32

        # GMF branch: elementwise product of MF embeddings (f32 on VPU).
        mf = mf_ref[0].astype(f32) * mf_ref[1].astype(f32)

        # Final affine as broadcast-mul + sublane reduce (VPU + XLU) instead of
        # two 1-row MXU dots; replaces cat([mlp_vector, mf_vector], -1).
        logits = (
            jnp.sum(w_aff_mlp * h, axis=0, keepdims=True)
            + jnp.sum(w_aff_mf * mf, axis=0, keepdims=True)
            + b_aff_ref[0, 0]
        )
        out_ref[...] = jax.nn.sigmoid(logits)

    return kernel


def _neumf_pallas(mlp_slab, mf_slab, params, *, tb):
    """One pallas_call over a batch-tiled grid; inputs are [feature, batch]."""
    d_in, b_pad = mlp_slab.shape
    _, d_mf, _ = mf_slab.shape
    assert b_pad % tb == 0
    grid = (b_pad // tb,)

    fc = params["fc"]
    w0, b0 = fc[0]
    assert w0.shape[1] == d_in, "layers[0] must equal 2 * latent_dim_mlp"
    h_last = fc[-1][0].shape[0]
    w_aff = params["w_aff"]
    assert w_aff.shape[1] == h_last + d_mf
    # Affine weight split into MLP/MF halves, as columns for the sublane reduce.
    w_aff_mlp = w_aff[:, :h_last].T          # (h_last, 1)
    w_aff_mf = w_aff[:, h_last:].T           # (d_mf, 1)
    b_aff = params["b_aff"].astype(jnp.float32)

    weights = [w0, b0]
    for w, b in fc[1:]:
        weights += [w, b]
    weights += [w_aff_mlp, w_aff_mf]

    emb_specs = [
        pl.BlockSpec((d_in, tb), lambda i: (0, i)),
        pl.BlockSpec((2, d_mf, tb), lambda i: (0, 0, i)),
    ]
    # Weights / biases: full-array blocks with constant index maps -> DMA'd
    # once, VMEM-resident across every grid step.
    weight_specs = [pl.BlockSpec(tuple(w.shape), lambda i: (0, 0)) for w in weights]
    b_aff_spec = pl.BlockSpec(memory_space=pltpu.MemorySpace.SMEM)

    macs = int(w0.size) + sum(int(w.size) for w, _ in fc[1:]) + h_last + d_mf
    cost = pl.CostEstimate(
        flops=2 * b_pad * macs + b_pad * d_mf,
        transcendentals=b_pad,
        bytes_accessed=(
            sum(int(x.size) * x.dtype.itemsize
                for x in (mlp_slab, mf_slab, *weights))
            + 4 + 4 * b_pad
        ),
    )

    return pl.pallas_call(
        _make_neumf_kernel(len(fc)),
        out_shape=jax.ShapeDtypeStruct((1, b_pad), jnp.float32),
        grid=grid,
        in_specs=emb_specs + weight_specs + [b_aff_spec],
        out_specs=pl.BlockSpec((1, tb), lambda i: (0, i)),
        compiler_params=pltpu.CompilerParams(
            dimension_semantics=("parallel",),
        ),
        cost_estimate=cost,
    )(mlp_slab, mf_slab, *weights, b_aff)


# --------------------------------- forward -----------------------------------


def neumf_forward(params, user_indices, item_indices, *, block_batch=1024):
    batch = user_indices.shape[0]
    b_pad = _round_up(batch, 128)            # pad only to lane multiple
    tb = _choose_tb(b_pad, block_batch)      # divides b_pad, >=2 steps if possible
    pad = b_pad - batch
    u_idx = jnp.pad(user_indices, (0, pad))
    i_idx = jnp.pad(item_indices, (0, pad))

    # Embedding gathers + concat + transpose stay in plain-JAX glue; XLA fuses
    # them into one producer of the lane/sublane-dense slabs below.
    # TODO(synk): for inference-only deployments, fold W0 into the MLP tables
    # offline (table @ W0_half.T) so layer 0 becomes gather+add.
    u_mlp = params["emb_user_mlp"][u_idx]                       # (b_pad, d_mlp)
    i_mlp = params["emb_item_mlp"][i_idx]
    mlp_slab = jnp.concatenate([u_mlp, i_mlp], axis=-1).T       # (2*d_mlp, b_pad)
    mf_slab = jnp.stack(
        [params["emb_user_mf"][u_idx].T, params["emb_item_mf"][i_idx].T], axis=0
    )                                                           # (2, d_mf, b_pad)

    out = _neumf_pallas(mlp_slab, mf_slab, params, tb=tb)
    return out[0, :batch].reshape(batch, 1)


def neumf_forward_ref(params, user_indices, item_indices):
    """Pure-JAX reference mirroring the PyTorch forward (f32 compute)."""
    f32 = lambda x: x.astype(jnp.float32)
    u_mlp = f32(params["emb_user_mlp"][user_indices])
    i_mlp = f32(params["emb_item_mlp"][item_indices])
    u_mf = f32(params["emb_user_mf"][user_indices])
    i_mf = f32(params["emb_item_mf"][item_indices])
    mlp = jnp.concatenate([u_mlp, i_mlp], axis=-1)
    for w, b in params["fc"]:
        mlp = jnp.maximum(mlp @ f32(w).T + f32(b).T, 0.0)
    mf = u_mf * i_mf
    vec = jnp.concatenate([mlp, mf], axis=-1)
    logits = vec @ f32(params["w_aff"]).T + params["b_aff"]
    return jax.nn.sigmoid(logits)


# --------------------------- parameter construction ---------------------------


def init_neumf_params(key, config, param_dtype=jnp.bfloat16):
    """Gaussian(0, 0.01) weights (weight_init_gaussian), torch-default biases.

    Weights kept in torch.nn.Linear (out, in) layout, stored bf16 (HBM win,
    native MXU dtype); biases stored as (out, 1) columns for batch-on-lanes.
    """
    std = 0.01
    num_users = config["num_users"]
    num_items = config["num_items"]
    d_mlp = config["latent_dim_mlp"]
    d_mf = config["latent_dim_mf"]
    layers = config["layers"]
    num_fc = len(layers) - 1

    keys = jax.random.split(key, 4 + 2 * num_fc + 2)
    k = iter(keys)

    params = {}
    params["emb_user_mlp"] = (std * jax.random.normal(next(k), (num_users, d_mlp), jnp.float32)).astype(param_dtype)
    params["emb_item_mlp"] = (std * jax.random.normal(next(k), (num_items, d_mlp), jnp.float32)).astype(param_dtype)
    params["emb_user_mf"] = (std * jax.random.normal(next(k), (num_users, d_mf), jnp.float32)).astype(param_dtype)
    params["emb_item_mf"] = (std * jax.random.normal(next(k), (num_items, d_mf), jnp.float32)).astype(param_dtype)

    fc = []
    for in_size, out_size in zip(layers[:-1], layers[1:]):
        w = (std * jax.random.normal(next(k), (out_size, in_size), jnp.float32)).astype(param_dtype)
        bound = 1.0 / (in_size ** 0.5)   # nn.init.normal_ only touches .weight
        b = jax.random.uniform(next(k), (out_size, 1), jnp.float32, -bound, bound).astype(param_dtype)
        fc.append((w, b))
    params["fc"] = fc

    aff_in = layers[-1] + d_mf
    params["w_aff"] = (std * jax.random.normal(next(k), (1, aff_in), jnp.float32)).astype(param_dtype)
    bound = 1.0 / (aff_in ** 0.5)
    params["b_aff"] = jax.random.uniform(next(k), (1, 1), jnp.float32, -bound, bound)
    return params


# ----------------------------------- main -------------------------------------

if __name__ == "__main__":
    config = {
        "num_users": 16,
        "num_items": 32,
        "latent_dim_mf": 8,
        "latent_dim_mlp": 8,
        "layers": [16, 32, 16, 8],   # layers[0] must equal 2 * latent_dim_mlp
        "weight_init_gaussian": True,
    }
    batch = 8

    key = jax.random.PRNGKey(0)
    k_param, k_user, k_item = jax.random.split(key, 3)
    params = init_neumf_params(k_param, config)

    user_indices = jax.random.randint(k_user, (batch,), 0, config["num_users"], jnp.int32)
    item_indices = jax.random.randint(k_item, (batch,), 0, config["num_items"], jnp.int32)

    fwd = jax.jit(neumf_forward)
    rating = jax.block_until_ready(fwd(params, user_indices, item_indices))

    rating_ref = jax.block_until_ready(neumf_forward_ref(params, user_indices, item_indices))
    assert rating.shape == (batch, 1)
    assert jnp.allclose(rating, rating_ref, atol=1e-3, rtol=1e-3), float(
        jnp.max(jnp.abs(rating - rating_ref))
    )

    print("KERNEL_OK")
</pallas_src>

<mosaic_0001>
module attributes {stable_mosaic.version = 11 : i64} {
  func.func @kernel(%arg0: i32, %arg1: memref<16x128xbf16, #tpu.memory_space<vmem>>, %arg2: memref<2x8x128xbf16, #tpu.memory_space<vmem>>, %arg3: memref<32x16xbf16, #tpu.memory_space<vmem>>, %arg4: memref<32x1xbf16, #tpu.memory_space<vmem>>, %arg5: memref<16x32xbf16, #tpu.memory_space<vmem>>, %arg6: memref<16x1xbf16, #tpu.memory_space<vmem>>, %arg7: memref<8x16xbf16, #tpu.memory_space<vmem>>, %arg8: memref<8x1xbf16, #tpu.memory_space<vmem>>, %arg9: memref<8x1xbf16, #tpu.memory_space<vmem>>, %arg10: memref<8x1xbf16, #tpu.memory_space<vmem>>, %arg11: memref<1x1xf32, #tpu.memory_space<smem>>, %arg12: memref<1x128xf32, #tpu.memory_space<vmem>>) attributes {dimension_semantics = [#tpu.dimension_semantics<parallel>], iteration_bounds = array<i64: 1>, scalar_prefetch = 0 : i64, scratch_operands = 0 : i64, tpu.core_type = #tpu.core_type<tc>, window_params = [{transform_indices = @transform_0, window_bounds = array<i64: 16, 128>}, {transform_indices = @transform_1, window_bounds = array<i64: 2, 8, 128>}, {pipeline_mode = #tpu.pipeline_mode<synchronous>, transform_indices = @transform_2, window_bounds = array<i64: 32, 16>}, {pipeline_mode = #tpu.pipeline_mode<synchronous>, transform_indices = @transform_3, window_bounds = array<i64: 32, 1>}, {pipeline_mode = #tpu.pipeline_mode<synchronous>, transform_indices = @transform_4, window_bounds = array<i64: 16, 32>}, {pipeline_mode = #tpu.pipeline_mode<synchronous>, transform_indices = @transform_5, window_bounds = array<i64: 16, 1>}, {pipeline_mode = #tpu.pipeline_mode<synchronous>, transform_indices = @transform_6, window_bounds = array<i64: 8, 16>}, {pipeline_mode = #tpu.pipeline_mode<synchronous>, transform_indices = @transform_7, window_bounds = array<i64: 8, 1>}, {pipeline_mode = #tpu.pipeline_mode<synchronous>, transform_indices = @transform_8, window_bounds = array<i64: 8, 1>}, {pipeline_mode = #tpu.pipeline_mode<synchronous>, transform_indices = @transform_9, window_bounds = array<i64: 8, 1>}, {transform_indices = @transform_10, window_bounds = array<i64: 1, 1>}, {transform_indices = @transform_11, window_bounds = array<i64: 1, 128>}]} {
    %c0 = arith.constant 0 : index
    %c0_0 = arith.constant 0 : index
    %0 = vector.load %arg1[%c0, %c0_0] : memref<16x128xbf16, #tpu.memory_space<vmem>>, vector<16x128xbf16>
    %c0_1 = arith.constant 0 : index
    %c0_2 = arith.constant 0 : index
    %1 = vector.load %arg3[%c0_1, %c0_2] : memref<32x16xbf16, #tpu.memory_space<vmem>>, vector<32x16xbf16>
    %c0_3 = arith.constant 0 : index
    %c0_4 = arith.constant 0 : index
    %2 = vector.load %arg4[%c0_3, %c0_4] : memref<32x1xbf16, #tpu.memory_space<vmem>>, vector<32x1xbf16>
    %3 = arith.extf %2 : vector<32x1xbf16> to vector<32x1xf32>
    %cst = arith.constant dense<0.000000e+00> : vector<32x128xf32>
    %4 = tpu.matmul %1, %0, %cst {dimension_numbers = #tpu.dot_dimension_numbers<[1], [0], [0], [1], [0, 0, 1, 1], [], []>} : vector<32x16xbf16>, vector<16x128xbf16>, vector<32x128xf32> -> vector<32x128xf32>
    %5 = vector.broadcast %3 : vector<32x1xf32> to vector<32x128xf32>
    %6 = arith.addf %4, %5 : vector<32x128xf32>
    %cst_5 = arith.constant 0.000000e+00 : f32
    %7 = vector.broadcast %cst_5 : f32 to vector<32x128xf32>
    %8 = arith.maximumf %6, %7 : vector<32x128xf32>
    %c0_6 = arith.constant 0 : index
    %c0_7 = arith.constant 0 : index
    %9 = vector.load %arg5[%c0_6, %c0_7] : memref<16x32xbf16, #tpu.memory_space<vmem>>, vector<16x32xbf16>
    %c0_8 = arith.constant 0 : index
    %c0_9 = arith.constant 0 : index
    %10 = vector.load %arg6[%c0_8, %c0_9] : memref<16x1xbf16, #tpu.memory_space<vmem>>, vector<16x1xbf16>
    %11 = arith.extf %10 : vector<16x1xbf16> to vector<16x1xf32>
    %12 = arith.truncf %8 : vector<32x128xf32> to vector<32x128xbf16>
    %cst_10 = arith.constant dense<0.000000e+00> : vector<16x128xf32>
    %13 = tpu.matmul %9, %12, %cst_10 {dimension_numbers = #tpu.dot_dimension_numbers<[1], [0], [0], [1], [0, 0, 1, 1], [], []>} : vector<16x32xbf16>, vector<32x128xbf16>, vector<16x128xf32> -> vector<16x128xf32>
    %14 = vector.broadcast %11 : vector<16x1xf32> to vector<16x128xf32>
    %15 = arith.addf %13, %14 : vector<16x128xf32>
    %cst_11 = arith.constant 0.000000e+00 : f32
    %16 = vector.broadcast %cst_11 : f32 to vector<16x128xf32>
    %17 = arith.maximumf %15, %16 : vector<16x128xf32>
    %c0_12 = arith.constant 0 : index
    %c0_13 = arith.constant 0 : index
    %18 = vector.load %arg7[%c0_12, %c0_13] : memref<8x16xbf16, #tpu.memory_space<vmem>>, vector<8x16xbf16>
    %c0_14 = arith.constant 0 : index
    %c0_15 = arith.constant 0 : index
    %19 = vector.load %arg8[%c0_14, %c0_15] : memref<8x1xbf16, #tpu.memory_space<vmem>>, vector<8x1xbf16>
    %20 = arith.extf %19 : vector<8x1xbf16> to vector<8x1xf32>
    %21 = arith.truncf %17 : vector<16x128xf32> to vector<16x128xbf16>
    %cst_16 = arith.constant dense<0.000000e+00> : vector<8x128xf32>
    %22 = tpu.matmul %18, %21, %cst_16 {dimension_numbers = #tpu.dot_dimension_numbers<[1], [0], [0], [1], [0, 0, 1, 1], [], []>} : vector<8x16xbf16>, vector<16x128xbf16>, vector<8x128xf32> -> vector<8x128xf32>
    %23 = vector.broadcast %20 : vector<8x1xf32> to vector<8x128xf32>
    %24 = arith.addf %22, %23 : vector<8x128xf32>
    %cst_17 = arith.constant 0.000000e+00 : f32
    %25 = vector.broadcast %cst_17 : f32 to vector<8x128xf32>
    %26 = arith.maximumf %24, %25 : vector<8x128xf32>
    %c0_18 = arith.constant 0 : index
    %c0_19 = arith.constant 0 : index
    %27 = vector.load %arg9[%c0_18, %c0_19] : memref<8x1xbf16, #tpu.memory_space<vmem>>, vector<8x1xbf16>
    %28 = arith.extf %27 : vector<8x1xbf16> to vector<8x1xf32>
    %c0_20 = arith.constant 0 : index
    %c0_21 = arith.constant 0 : index
    %29 = vector.load %arg10[%c0_20, %c0_21] : memref<8x1xbf16, #tpu.memory_space<vmem>>, vector<8x1xbf16>
    %30 = arith.extf %29 : vector<8x1xbf16> to vector<8x1xf32>
    %c0_22 = arith.constant 0 : index
    %c0_23 = arith.constant 0 : index
    %c0_24 = arith.constant 0 : index
    %31 = vector.load %arg2[%c0_22, %c0_23, %c0_24] : memref<2x8x128xbf16, #tpu.memory_space<vmem>>, vector<1x8x128xbf16>
    %32 = vector.shape_cast %31 : vector<1x8x128xbf16> to vector<8x128xbf16>
    %33 = arith.extf %32 : vector<8x128xbf16> to vector<8x128xf32>
    %c1 = arith.constant 1 : index
    %c0_25 = arith.constant 0 : index
    %c0_26 = arith.constant 0 : index
    %34 = vector.load %arg2[%c1, %c0_25, %c0_26] : memref<2x8x128xbf16, #tpu.memory_space<vmem>>, vector<1x8x128xbf16>
    %35 = vector.shape_cast %34 : vector<1x8x128xbf16> to vector<8x128xbf16>
    %36 = arith.extf %35 : vector<8x128xbf16> to vector<8x128xf32>
    %37 = arith.mulf %33, %36 : vector<8x128xf32>
    %38 = vector.broadcast %28 : vector<8x1xf32> to vector<8x128xf32>
    %39 = arith.mulf %38, %26 : vector<8x128xf32>
    %cst_27 = arith.constant dense<0.000000e+00> : vector<128xf32>
    %40 = vector.multi_reduction <add>, %39, %cst_27 [0] : vector<8x128xf32> to vector<128xf32>
    %41 = vector.shape_cast %40 : vector<128xf32> to vector<1x128xf32>
    %42 = vector.broadcast %30 : vector<8x1xf32> to vector<8x128xf32>
    %43 = arith.mulf %42, %37 : vector<8x128xf32>
    %cst_28 = arith.constant dense<0.000000e+00> : vector<128xf32>
    %44 = vector.multi_reduction <add>, %43, %cst_28 [0] : vector<8x128xf32> to vector<128xf32>
    %45 = vector.shape_cast %44 : vector<128xf32> to vector<1x128xf32>
    %46 = arith.addf %41, %45 : vector<1x128xf32>
    %c0_29 = arith.constant 0 : index
    %c0_30 = arith.constant 0 : index
    %47 = memref.load %arg11[%c0_29, %c0_30] : memref<1x1xf32, #tpu.memory_space<smem>>
    %48 = vector.broadcast %47 : f32 to vector<1x128xf32>
    %49 = arith.addf %46, %48 : vector<1x128xf32>
    %50 = arith.negf %49 : vector<1x128xf32>
    %51 = math.exp %50 : vector<1x128xf32>
    %cst_31 = arith.constant 1.000000e+00 : f32
    %52 = vector.broadcast %cst_31 : f32 to vector<1x128xf32>
    %53 = arith.addf %52, %51 : vector<1x128xf32>
    %54 = arith.divf %52, %53 : vector<1x128xf32>
    %c0_32 = arith.constant 0 : index
    %c0_33 = arith.constant 0 : index
    %55 = vector.load %arg12[%c0_32, %c0_33] : memref<1x128xf32, #tpu.memory_space<vmem>>, vector<1x128xf32>
    tpu.vector_store %arg12[%c0_32, %c0_33], %54 {strides = array<i32>} : memref<1x128xf32, #tpu.memory_space<vmem>>, vector<1x128xf32>,
    return
  }
  func.func @transform_0(%arg0: i32) -> (i32, i32) {
    %c0_i32 = arith.constant 0 : i32
    %c0_i32_0 = arith.constant 0 : i32
    return %c0_i32, %arg0 : i32, i32
  }
  func.func @transform_1(%arg0: i32) -> (i32, i32, i32) {
    %c0_i32 = arith.constant 0 : i32
    %c0_i32_0 = arith.constant 0 : i32
    %c0_i32_1 = arith.constant 0 : i32
    return %c0_i32, %c0_i32_0, %arg0 : i32, i32, i32
  }
  func.func @transform_2(%arg0: i32) -> (i32, i32) {
    %c0_i32 = arith.constant 0 : i32
    %c0_i32_0 = arith.constant 0 : i32
    %c0_i32_1 = arith.constant 0 : i32
    return %c0_i32, %c0_i32_0 : i32, i32
  }
  func.func @transform_3(%arg0: i32) -> (i32, i32) {
    %c0_i32 = arith.constant 0 : i32
    %c0_i32_0 = arith.constant 0 : i32
    %c0_i32_1 = arith.constant 0 : i32
    return %c0_i32, %c0_i32_0 : i32, i32
  }
  func.func @transform_4(%arg0: i32) -> (i32, i32) {
    %c0_i32 = arith.constant 0 : i32
    %c0_i32_0 = arith.constant 0 : i32
    %c0_i32_1 = arith.constant 0 : i32
    return %c0_i32, %c0_i32_0 : i32, i32
  }
  func.func @transform_5(%arg0: i32) -> (i32, i32) {
    %c0_i32 = arith.constant 0 : i32
    %c0_i32_0 = arith.constant 0 : i32
    %c0_i32_1 = arith.constant 0 : i32
    return %c0_i32, %c0_i32_0 : i32, i32
  }
  func.func @transform_6(%arg0: i32) -> (i32, i32) {
    %c0_i32 = arith.constant 0 : i32
    %c0_i32_0 = arith.constant 0 : i32
    %c0_i32_1 = arith.constant 0 : i32
    return %c0_i32, %c0_i32_0 : i32, i32
  }
  func.func @transform_7(%arg0: i32) -> (i32, i32) {
    %c0_i32 = arith.constant 0 : i32
    %c0_i32_0 = arith.constant 0 : i32
    %c0_i32_1 = arith.constant 0 : i32
    return %c0_i32, %c0_i32_0 : i32, i32
  }
  func.func @transform_8(%arg0: i32) -> (i32, i32) {
    %c0_i32 = arith.constant 0 : i32
    %c0_i32_0 = arith.constant 0 : i32
    %c0_i32_1 = arith.constant 0 : i32
    return %c0_i32, %c0_i32_0 : i32, i32
  }
  func.func @transform_9(%arg0: i32) -> (i32, i32) {
    %c0_i32 = arith.constant 0 : i32
    %c0_i32_0 = arith.constant 0 : i32
    %c0_i32_1 = arith.constant 0 : i32
    return %c0_i32, %c0_i32_0 : i32, i32
  }
  func.func @transform_10(%arg0: i32) -> (i32, i32) {
    %c0_i32 = arith.constant 0 : i32
    %c0_i32_0 = arith.constant 0 : i32
    %c0_i32_1 = arith.constant 0 : i32
    return %c0_i32, %c0_i32_0 : i32, i32
  }
  func.func @transform_11(%arg0: i32) -> (i32, i32) {
    %c0_i32 = arith.constant 0 : i32
    %c0_i32_0 = arith.constant 0 : i32
    return %c0_i32, %arg0 : i32, i32
  }
}

</mosaic_0001>

<llo_original>
// kernel: neumf_forward.1
$region0: #{neumf_forward.1}
  #allocation0 [shape = 'u32[]', space=smem, size = 0x4, offset = 0x4, fixed_abs, tag = 'smem constant byte address 0x4 - core index']
  #allocation1 [shape = 'u32[72,128]{1,0:T(1,128)}', space=vmem, size = 0x9000, scoped, tag = 'internal scratch']
  #allocation2 [shape = 'f32[1,1]{1,0:T(1,128)S(6)}', space=smem, size = 0x200, scoped, tag = 'scoped memory for neumf_forward.1']
  %s0 = inlined_call_operand.vmem [shape: bf16[16,128], index: 0, kind: input, shape index: {}]
  %s1 = inlined_call_operand.vmem [shape: bf16[2,8,128], index: 1, kind: input, shape index: {}]
  %s2 = inlined_call_operand.vmem [shape: bf16[32,16], index: 2, kind: input, shape index: {}]
  %s3 = inlined_call_operand.vmem [shape: bf16[32,1], index: 3, kind: input, shape index: {}]
  %s4 = inlined_call_operand.vmem [shape: bf16[16,32], index: 4, kind: input, shape index: {}]
  %s5 = inlined_call_operand.vmem [shape: bf16[16,1], index: 5, kind: input, shape index: {}]
  %s6 = inlined_call_operand.vmem [shape: bf16[8,16], index: 6, kind: input, shape index: {}]
  %s7 = inlined_call_operand.vmem [shape: bf16[8,1], index: 7, kind: input, shape index: {}]
  %s8 = inlined_call_operand.vmem [shape: bf16[8,1], index: 8, kind: input, shape index: {}]
  %s9 = inlined_call_operand.vmem [shape: bf16[8,1], index: 9, kind: input, shape index: {}]
  %s10 = inlined_call_operand.<no memory space> [shape: f32[1,1], index: 10, kind: input, shape index: {}]
  %s11 = inlined_call_operand.vmem [shape: f32[1,128], index: 11, kind: output, shape index: {}]
  %s12 = sld [smem:[#allocation0]]
  $region54: #{neumf_forward.1} parent=0
    _
  %s14 = ssub.s32 1, %s12
  %s15 = scalar_select 0, %s14, %s12
  %16 = sst [smem:[#allocation2]] %s10
  // Predicated region
  $region2: #{neumf_forward.1} parent=0 // pred_check
    _
  $region3: #{neumf_forward.1} parent=0 // pred_check_branch
    %18 = sbr.rel (0) target = $region5
  $region4: #{neumf_forward.1} parent=0 // pred_region
    _
  $region5: #{neumf_forward.1} parent=0 // pred_fallthru
    _
  // Predicated region
  $region6: #{neumf_forward.1} parent=0 // pred_check
    _
  $region7: #{neumf_forward.1} parent=0 // pred_check_branch
    %20 = sbr.rel (0) target = $region9
  $region8: #{neumf_forward.1} parent=0 // pred_region
    _
  $region9: #{neumf_forward.1} parent=0 // pred_fallthru
    _
  // Predicated region
  $region10: #{neumf_forward.1} parent=0 // pred_check
    _
  $region11: #{neumf_forward.1} parent=0 // pred_check_branch
    %22 = sbr.rel (0) target = $region13
  $region12: #{neumf_forward.1} parent=0 // pred_region
    _
  $region13: #{neumf_forward.1} parent=0 // pred_fallthru
    _
  // Predicated region
  $region14: #{neumf_forward.1} parent=0 // pred_check
    _
  $region15: #{neumf_forward.1} parent=0 // pred_check_branch
    %24 = sbr.rel (0) target = $region17
  $region16: #{neumf_forward.1} parent=0 // pred_region
    _
  $region17: #{neumf_forward.1} parent=0 // pred_fallthru
    _
  // Predicated region
  $region18: #{neumf_forward.1} parent=0 // pred_check
    _
  $region19: #{neumf_forward.1} parent=0 // pred_check_branch
    %26 = sbr.rel (0) target = $region21
  $region20: #{neumf_forward.1} parent=0 // pred_region
    _
  $region21: #{neumf_forward.1} parent=0 // pred_fallthru
    _
  // Predicated region
  $region22: #{neumf_forward.1} parent=0 // pred_check
    _
  $region23: #{neumf_forward.1} parent=0 // pred_check_branch
    %28 = sbr.rel (0) target = $region25
  $region24: #{neumf_forward.1} parent=0 // pred_region
    _
  $region25: #{neumf_forward.1} parent=0 // pred_fallthru
    _
  // Predicated region
  $region26: #{neumf_forward.1} parent=0 // pred_check
    _
  $region27: #{neumf_forward.1} parent=0 // pred_check_branch
    %30 = sbr.rel (0) target = $region29
  $region28: #{neumf_forward.1} parent=0 // pred_region
    _
  $region29: #{neumf_forward.1} parent=0 // pred_fallthru
    _
  // Predicated region
  $region30: #{neumf_forward.1} parent=0 // pred_check
    _
  $region31: #{neumf_forward.1} parent=0 // pred_check_branch
    %32 = sbr.rel (0) target = $region33
  $region32: #{neumf_forward.1} parent=0 // pred_region
    _
  $region33: #{neumf_forward.1} parent=0 // pred_fallthru
    _
  // Predicated region
  $region34: #{neumf_forward.1} parent=0 // pred_check
    _
  $region35: #{neumf_forward.1} parent=0 // pred_check_branch
    %34 = sbr.rel (0) target = $region37
  $region36: #{neumf_forward.1} parent=0 // pred_region
    _
  $region37: #{neumf_forward.1} parent=0 // pred_fallthru
    _
  // Predicated region
  $region38: #{neumf_forward.1} parent=0 // pred_check
    _
  $region39: #{neumf_forward.1} parent=0 // pred_check_branch
    %36 = sbr.rel (0) target = $region41
  $region40: #{neumf_forward.1} parent=0 // pred_region
    _
  $region41: #{neumf_forward.1} parent=0 // pred_fallthru
    _
  // Predicated region
  $region42: #{neumf_forward.1} parent=0 // pred_check
    _
  $region43: #{neumf_forward.1} parent=0 // pred_check_branch
    %38 = sbr.rel (0) target = $region45
  $region44: #{neumf_forward.1} parent=0 // pred_region
    _
  $region45: #{neumf_forward.1} parent=0 // pred_fallthru
    _
  %v40 = vld [vmem:[%s0] sm:$0xf]
  %v41 = vld [vmem:[%s0 + $0x4] sm:$0xf]
  %v42 = vld [vmem:[%s2] sm:$0xf]
  %v43 = vld [vmem:[%s2 + $0x4] sm:$0xf]
  %v44 = vld [vmem:[%s2 + $0x8] sm:$0xf]
  %v45 = vld [vmem:[%s2 + $0xc] sm:$0xf]
  %v46 = vld [vmem:[%s3] sm:$0xf]
  %v47 = vld [vmem:[%s3 + $0x4] sm:$0xf]
  %v48 = vld [vmem:[%s3 + $0x8] sm:$0xf]
  %v49 = vld [vmem:[%s3 + $0xc] sm:$0xf]
  %v50 = vunpack.c.l.bf16 %v46
  %v51 = vunpack.c.l.bf16 %v47
  %v52 = vunpack.c.l.bf16 %v48
  %v53 = vunpack.c.l.bf16 %v49
  %55 = vset.pattern.permute.xlu0 0
  %56 = vperm.xlu0 %55, %v50
  %v57 = vpop.permute.xlu0 %56
  %60 = vset.pattern.permute.xlu0 0
  %61 = vperm.xlu0 %60, %v51
  %v62 = vpop.permute.xlu0 %61
  %65 = vset.pattern.permute.xlu0 0
  %66 = vperm.xlu0 %65, %v52
  %v67 = vpop.permute.xlu0 %66
  %70 = vset.pattern.permute.xlu0 0
  %71 = vperm.xlu0 %70, %v53
  %v72 = vpop.permute.xlu0 %71
  %v78 = vunpack.c.l.b16 %v42
  %v79 = vunpack.c.l.b16 %v43
  %v80 = vunpack.c.l.b16 %v44
  %v81 = vunpack.c.l.b16 %v45
  %v82 = vpack.c.b16 %v79, %v78
  %v83 = vpack.c.b16 %v81, %v80
  %v86 = vunpack.c.l.b16 %v40
  %v87 = vunpack.c.l.b16 %v41
  %v88 = vpack.c.b16 %v87, %v86
  %vm90 = vcmask 130048
  %v92 = vsel %vm90, %v82, 0
  %v95 = vsel %vm90, %v83, 0
  %97 = vmatpush.bf16.msra.mxu0 0
  %98 = vmatpush.bf16.msra.mxu0 0
  %99 = vmatpush.bf16.msra.mxu0 0
  %100 = vmatpush.bf16.msra.mxu0 0
  %101 = vmatpush.bf16.msra.mxu0 0
  %102 = vmatpush.bf16.msra.mxu0 0
  %103 = vmatpush.bf16.msra.mxu0 0
  %104 = vmatpush.bf16.msra.mxu0 %v88
  %105 = vmatmul.bf16.gmra.mxu0 %v92
  %v106 = vpop.f32.mrf.mxu0
  %v107 = vadd.f32 %v57, %v106
  %v108 = vpop.f32.mrf.mxu0
  %v109 = vadd.f32 %v62, %v108
  %110 = vmatmul.bf16.gmra.mxu0 %v95
  %v111 = vpop.f32.mrf.mxu0
  %v112 = vadd.f32 %v67, %v111
  %v113 = vpop.f32.mrf.mxu0
  %v114 = vadd.f32 %v72, %v113
  %115 = vdwg.mxu0
  %v116 = vmax.f32 %v107, 0.0
  %v117 = vmax.f32 %v109, 0.0
  %v118 = vmax.f32 %v112, 0.0
  %v119 = vmax.f32 %v114, 0.0
  %v120 = vld [vmem:[%s4] sm:$0xf]
  %v121 = vld [vmem:[%s4 + $0x4] sm:$0xf]
  %v122 = vld [vmem:[%s5] sm:$0xf]
  %v123 = vld [vmem:[%s5 + $0x4] sm:$0xf]
  %v124 = vunpack.c.l.bf16 %v122
  %v125 = vunpack.c.l.bf16 %v123
  %v126 = vpack.c.bf16 %v117, %v116
  %v127 = vpack.c.bf16 %v119, %v118
  %129 = vset.pattern.permute.xlu0 0
  %130 = vperm.xlu0 %129, %v124
  %v131 = vpop.permute.xlu0 %130
  %134 = vset.pattern.permute.xlu0 0
  %135 = vperm.xlu0 %134, %v125
  %v136 = vpop.permute.xlu0 %135
  %v140 = vunpack.c.l.b16 %v120
  %v141 = vunpack.c.l.b16 %v121
  %v142 = vpack.c.b16 %v141, %v140
  %vm143 = vcmask 261120
  %v145 = vsel %vm143, %v142, 0
  %147 = vmatpush.bf16.msra.mxu0 0
  %148 = vmatpush.bf16.msra.mxu0 0
  %149 = vmatpush.bf16.msra.mxu0 0
  %150 = vmatpush.bf16.msra.mxu0 0
  %151 = vmatpush.bf16.msra.mxu0 0
  %152 = vmatpush.bf16.msra.mxu0 0
  %153 = vmatpush.bf16.msra.mxu0 %v127
  %154 = vmatpush.bf16.msra.mxu0 %v126
  %155 = vmatmul.bf16.gmra.mxu0 %v145
  %v156 = vpop.f32.mrf.mxu0
  %v157 = vadd.f32 %v131, %v156
  %v158 = vpop.f32.mrf.mxu0
  %v159 = vadd.f32 %v136, %v158
  %160 = vdwg.mxu0
  %v161 = vmax.f32 %v157, 0.0
  %v162 = vmax.f32 %v159, 0.0
  %v163 = vld [vmem:[%s6] sm:$0xf]
  %v164 = vld [vmem:[%s7] sm:$0xf]
  %v165 = vunpack.c.l.bf16 %v164
  %v166 = vpack.c.bf16 %v162, %v161
  %168 = vset.pattern.permute.xlu0 0
  %169 = vperm.xlu0 %168, %v165
  %v170 = vpop.permute.xlu0 %169
  %v173 = vsel %vm90, %v163, 0
  %175 = vmatpush.bf16.msra.mxu0 0
  %176 = vmatpush.bf16.msra.mxu0 0
  %177 = vmatpush.bf16.msra.mxu0 0
  %178 = vmatpush.bf16.msra.mxu0 0
  %179 = vmatpush.bf16.msra.mxu0 0
  %180 = vmatpush.bf16.msra.mxu0 0
  %181 = vmatpush.bf16.msra.mxu0 0
  %182 = vmatpush.bf16.msra.mxu0 %v166
  %183 = vmatmul.bf16.gmra.mxu0 %v173
  %v184 = vpop.f32.mrf.mxu0
  %v185 = vadd.f32 %v170, %v184
  %v186 = vpop.f32.mrf.mxu0
  %187 = vdwg.mxu0
  %v188 = vmax.f32 %v185, 0.0
  %v189 = vld [vmem:[%s8] sm:$0xf]
  %v190 = vunpack.c.l.bf16 %v189
  %v191 = vld [vmem:[%s9] sm:$0xf]
  %v192 = vunpack.c.l.bf16 %v191
  %v193 = vld [vmem:[%s1] sm:$0xf]
  %v194 = vunpack.c.l.bf16 %v193
  %s195 = scalar_lea.vmem %s1, 4
  %v196 = vld [vmem:[%s195] sm:$0xf]
  %v197 = vunpack.c.l.bf16 %v196
  %v198 = vmul.f32 %v194, %v197
  %200 = vset.pattern.permute.xlu0 0
  %201 = vperm.xlu0 %200, %v190
  %v202 = vpop.permute.xlu0 %201
  %v204 = vmul.f32 %v202, %v188
  %v205 = vrot.slane %v204, 4
  %v206 = vadd.f32 %v204, %v205
  %v207 = vrot.slane %v206, 2
  %v208 = vadd.f32 %v206, %v207
  %v209 = vrot.slane %v208, 1
  %v210 = vadd.f32 %v208, %v209
  %212 = vset.pattern.permute.xlu0 0
  %213 = vperm.xlu0 %212, %v192
  %v214 = vpop.permute.xlu0 %213
  %v216 = vmul.f32 %v214, %v198
  %v217 = vrot.slane %v216, 4
  %v218 = vadd.f32 %v216, %v217
  %v219 = vrot.slane %v218, 2
  %v220 = vadd.f32 %v218, %v219
  %v221 = vrot.slane %v220, 1
  %v222 = vadd.f32 %v220, %v221
  %v223 = vadd.f32 %v210, %v222
  %s224 = sld [smem:[#allocation2]]
  %v225 = vstv %s224
  %v226 = vadd.f32 %v223, %v225
  %v227 = vxor.u32 %v226, 2147483648
  %v228 = vmul.f32 %v227, 1.442695
  %v229 = vpow.pop %v228
  %v230 = vadd.f32 %v229, 1.0
  %v231 = vrcp.pop %v230
  %v232 = vmul.f32 %v230, %v231
  %v233 = vsub.f32 1.0, %v232
  %v234 = vmul.f32 %v231, %v233
  %v235 = vadd.f32 %v231, %v234
  %vm236 = vweird.f32 %v230
  %vm237 = vweird.f32 %v231
  %vm238 = vmor %vm236, %vm237
  %v239 = vsel %vm238, %v231, %v235
  %v240 = vand.u32 2147483647, %v230
  %vm241 = vcmp.eq.f32.partialorder %v240, 8.507059e+37
  %v242 = vand.u32 %v230, 2147483648
  %v243 = vor.u32 1.1754944e-38, %v242
  %v244 = vsel %vm241, %v243, %v239
  %v245 = vmul.f32 1.0, %v244
  %246 = vst [vmem:[%s11] sm:$0x1] %v245
  // Predicated region
  $region46: #{neumf_forward.1} parent=0 // pred_check
    _
  $region47: #{neumf_forward.1} parent=0 // pred_check_branch
    %248 = sbr.rel (0) target = $region49
  $region48: #{neumf_forward.1} parent=0 // pred_region
    _
  $region49: #{neumf_forward.1} parent=0 // pred_fallthru
    _
  // Predicated region
  $region50: #{neumf_forward.1} parent=0 // pred_check
    _
  $region51: #{neumf_forward.1} parent=0 // pred_check_branch
    %250 = sbr.rel (0) target = $region53
  $region52: #{neumf_forward.1} parent=0 // pred_region
    _
  $region53: #{neumf_forward.1} parent=0 // pred_fallthru
    _

</llo_original>
